<compile_context>
chip_gen: v7x
topology: tpu7x:2x2x1
jax: 0.10.0
libtpu: 0.0.40
codegen_flags: <defaults>
</compile_context>

<pallas_src>
import jax
import jax.numpy as jnp
from jax import lax
from jax.experimental import pallas as pl
from jax.experimental.pallas import tpu as pltpu

# Problem sizes (small, consistent with the module).
N, C, H, W = 2, 4, 16, 16
HW = H * W
SHRINK = 0.25
HID = int(C * SHRINK)            # hidden_dim = int(dim * shrinkage_rate) = 1

# Packed parameter layout inside the single SMEM buffer.
OFF_W1 = 0                       # (HID, C) row-major   -> squeeze conv weight
OFF_B1 = OFF_W1 + HID * C        # (HID,)               -> squeeze conv bias
OFF_W2 = OFF_B1 + HID            # (C, HID) row-major   -> excite conv weight
OFF_B2 = OFF_W2 + C * HID        # (C,)                 -> excite conv bias
P_LEN = OFF_B2 + C


def se_kernel(p_ref, x_ref, o_ref):
    # Full batch, lane-dense: (N*C, H*W) = (8, 256) -> exactly 2 f32 vregs.
    x = x_ref[...]
    inv_hw = 1.0 / float(HW)

    # ---- AdaptiveAvgPool2d(1): per-(image,channel) global mean -> (N*C, 1) ----
    pooled = jnp.sum(x, axis=-1, keepdims=True) * inv_hw

    gates = []
    for n in range(N):
        # ---- squeeze 1x1 conv (C -> HID) + exact (erf) GELU; scalar weights from SMEM ----
        hid = []
        for h in range(HID):
            z = pooled[n * C + 0:n * C + 1, :] * p_ref[OFF_W1 + h * C + 0]
            for c in range(1, C):
                z = z + pooled[n * C + c:n * C + c + 1, :] * p_ref[OFF_W1 + h * C + c]
            z = z + p_ref[OFF_B1 + h]
            # exact GELU (torch.nn.GELU default): 0.5 * z * (1 + erf(z / sqrt(2)))
            hid.append(0.5 * z * (1.0 + lax.erf(z * 0.7071067811865476)))  # (1, 1)

        # ---- excite 1x1 conv (HID -> C) + sigmoid -> per-channel gates ----
        for c in range(C):
            g = hid[0] * p_ref[OFF_W2 + c * HID + 0]
            for h in range(1, HID):
                g = g + hid[h] * p_ref[OFF_W2 + c * HID + h]
            g = g + p_ref[OFF_B2 + c]
            gates.append(jax.nn.sigmoid(g))                                # (1, 1)

    gate = jnp.concatenate(gates, axis=0)                                  # (N*C, 1)

    # ---- scale: single unmasked, lane-dense full-tile store ----
    o_ref[...] = x * gate


def squeeze_excitation(x, w1, b1, w2, b2):
    n, c, h, w = x.shape
    hw = h * w
    # Lane-dense layout plumbing in the wrapper (layout, not compute).
    x_flat = x.reshape(n * c, hw).astype(jnp.float32)
    packed = jnp.concatenate(
        [w1.reshape(-1), b1.reshape(-1), w2.reshape(-1), b2.reshape(-1)]
    ).astype(jnp.float32)
    assert packed.shape[0] == P_LEN

    out = pl.pallas_call(
        se_kernel,
        out_shape=jax.ShapeDtypeStruct((n * c, hw), jnp.float32),
        in_specs=[pl.BlockSpec(memory_space=pltpu.MemorySpace.SMEM),
                  pl.BlockSpec(memory_space=pltpu.MemorySpace.VMEM)],
        out_specs=pl.BlockSpec(memory_space=pltpu.MemorySpace.VMEM),
    )(packed, x_flat)
    return out.reshape(n, c, h, w)


# ---------------- plain-JAX reference (for verification only) ----------------
def reference(x, w1, b1, w2, b2):
    pooled = jnp.mean(x, axis=(2, 3), keepdims=True)                     # (N, C, 1, 1)
    z = jnp.einsum('nchw,oc->nohw', pooled, w1) + b1[None, :, None, None]
    z = jax.nn.gelu(z, approximate=False)                                # exact GELU
    g = jnp.einsum('nihw,oi->nohw', z, w2) + b2[None, :, None, None]
    g = jax.nn.sigmoid(g)
    return x * g


if __name__ == "__main__":
    key = jax.random.PRNGKey(0)
    keys = jax.random.split(key, 5)

    # Deterministic synthetic inputs / parameters (shapes follow nn.Conv2d in __init__).
    x = jax.random.normal(keys[0], (N, C, H, W), jnp.float32)
    w1 = 0.5 * jax.random.normal(keys[1], (HID, C), jnp.float32)   # Conv2d(dim, hidden, 1)
    b1 = 0.1 * jax.random.normal(keys[2], (HID,), jnp.float32)
    w2 = 0.5 * jax.random.normal(keys[3], (C, HID), jnp.float32)   # Conv2d(hidden, dim, 1)
    b2 = 0.1 * jax.random.normal(keys[4], (C,), jnp.float32)

    out = jax.block_until_ready(squeeze_excitation(x, w1, b1, w2, b2))
    ref = jax.block_until_ready(reference(x, w1, b1, w2, b2))

    err = float(jnp.max(jnp.abs(out - ref)))
    assert err < 1e-3, f"mismatch vs reference: max abs err = {err}"

    print("KERNEL_OK")
</pallas_src>

<mosaic_0001>
module attributes {stable_mosaic.version = 11 : i64} {
  func.func @se_kernel(%arg0: memref<13xf32, #tpu.memory_space<smem>>, %arg1: memref<8x256xf32, #tpu.memory_space<vmem>>, %arg2: memref<8x256xf32, #tpu.memory_space<vmem>>) attributes {dimension_semantics = [], scalar_prefetch = 0 : i64, scratch_operands = 0 : i64, tpu.core_type = #tpu.core_type<tc>} {
    %c0 = arith.constant 0 : index
    %c0_0 = arith.constant 0 : index
    %0 = vector.load %arg1[%c0, %c0_0] : memref<8x256xf32, #tpu.memory_space<vmem>>, vector<8x256xf32>
    %cst = arith.constant dense<0.000000e+00> : vector<8xf32>
    %1 = vector.multi_reduction <add>, %0, %cst [1] : vector<8x256xf32> to vector<8xf32>
    %2 = vector.shape_cast %1 : vector<8xf32> to vector<8x1xf32>
    %cst_1 = arith.constant 3.906250e-03 : f32
    %3 = vector.broadcast %cst_1 : f32 to vector<8x1xf32>
    %4 = arith.mulf %2, %3 : vector<8x1xf32>
    %5 = vector.extract_strided_slice %4 {offsets = [0, 0], sizes = [1, 1], strides = [1, 1]} : vector<8x1xf32> to vector<1x1xf32>
    %c0_2 = arith.constant 0 : index
    %6 = memref.load %arg0[%c0_2] : memref<13xf32, #tpu.memory_space<smem>>
    %7 = vector.broadcast %6 : f32 to vector<1x1xf32>
    %8 = arith.mulf %5, %7 : vector<1x1xf32>
    %9 = vector.extract_strided_slice %4 {offsets = [1, 0], sizes = [1, 1], strides = [1, 1]} : vector<8x1xf32> to vector<1x1xf32>
    %c1 = arith.constant 1 : index
    %10 = memref.load %arg0[%c1] : memref<13xf32, #tpu.memory_space<smem>>
    %11 = vector.broadcast %10 : f32 to vector<1x1xf32>
    %12 = arith.mulf %9, %11 : vector<1x1xf32>
    %13 = arith.addf %8, %12 : vector<1x1xf32>
    %14 = vector.extract_strided_slice %4 {offsets = [2, 0], sizes = [1, 1], strides = [1, 1]} : vector<8x1xf32> to vector<1x1xf32>
    %c2 = arith.constant 2 : index
    %15 = memref.load %arg0[%c2] : memref<13xf32, #tpu.memory_space<smem>>
    %16 = vector.broadcast %15 : f32 to vector<1x1xf32>
    %17 = arith.mulf %14, %16 : vector<1x1xf32>
    %18 = arith.addf %13, %17 : vector<1x1xf32>
    %19 = vector.extract_strided_slice %4 {offsets = [3, 0], sizes = [1, 1], strides = [1, 1]} : vector<8x1xf32> to vector<1x1xf32>
    %c3 = arith.constant 3 : index
    %20 = memref.load %arg0[%c3] : memref<13xf32, #tpu.memory_space<smem>>
    %21 = vector.broadcast %20 : f32 to vector<1x1xf32>
    %22 = arith.mulf %19, %21 : vector<1x1xf32>
    %23 = arith.addf %18, %22 : vector<1x1xf32>
    %c4 = arith.constant 4 : index
    %24 = memref.load %arg0[%c4] : memref<13xf32, #tpu.memory_space<smem>>
    %25 = vector.broadcast %24 : f32 to vector<1x1xf32>
    %26 = arith.addf %23, %25 : vector<1x1xf32>
    %cst_3 = arith.constant 5.000000e-01 : f32
    %27 = vector.broadcast %cst_3 : f32 to vector<1x1xf32>
    %28 = arith.mulf %27, %26 : vector<1x1xf32>
    %cst_4 = arith.constant 0.707106769 : f32
    %29 = vector.broadcast %cst_4 : f32 to vector<1x1xf32>
    %30 = arith.mulf %26, %29 : vector<1x1xf32>
    %31 = math.erf %30 : vector<1x1xf32>
    %cst_5 = arith.constant 1.000000e+00 : f32
    %32 = vector.broadcast %cst_5 : f32 to vector<1x1xf32>
    %33 = arith.addf %32, %31 : vector<1x1xf32>
    %34 = arith.mulf %28, %33 : vector<1x1xf32>
    %c5 = arith.constant 5 : index
    %35 = memref.load %arg0[%c5] : memref<13xf32, #tpu.memory_space<smem>>
    %36 = vector.broadcast %35 : f32 to vector<1x1xf32>
    %37 = arith.mulf %34, %36 : vector<1x1xf32>
    %c9 = arith.constant 9 : index
    %38 = memref.load %arg0[%c9] : memref<13xf32, #tpu.memory_space<smem>>
    %39 = vector.broadcast %38 : f32 to vector<1x1xf32>
    %40 = arith.addf %37, %39 : vector<1x1xf32>
    %41 = arith.negf %40 : vector<1x1xf32>
    %42 = math.exp %41 : vector<1x1xf32>
    %cst_6 = arith.constant 1.000000e+00 : f32
    %43 = vector.broadcast %cst_6 : f32 to vector<1x1xf32>
    %44 = arith.addf %43, %42 : vector<1x1xf32>
    %45 = arith.divf %43, %44 : vector<1x1xf32>
    %c6 = arith.constant 6 : index
    %46 = memref.load %arg0[%c6] : memref<13xf32, #tpu.memory_space<smem>>
    %47 = vector.broadcast %46 : f32 to vector<1x1xf32>
    %48 = arith.mulf %34, %47 : vector<1x1xf32>
    %c10 = arith.constant 10 : index
    %49 = memref.load %arg0[%c10] : memref<13xf32, #tpu.memory_space<smem>>
    %50 = vector.broadcast %49 : f32 to vector<1x1xf32>
    %51 = arith.addf %48, %50 : vector<1x1xf32>
    %52 = arith.negf %51 : vector<1x1xf32>
    %53 = math.exp %52 : vector<1x1xf32>
    %cst_7 = arith.constant 1.000000e+00 : f32
    %54 = vector.broadcast %cst_7 : f32 to vector<1x1xf32>
    %55 = arith.addf %54, %53 : vector<1x1xf32>
    %56 = arith.divf %54, %55 : vector<1x1xf32>
    %c7 = arith.constant 7 : index
    %57 = memref.load %arg0[%c7] : memref<13xf32, #tpu.memory_space<smem>>
    %58 = vector.broadcast %57 : f32 to vector<1x1xf32>
    %59 = arith.mulf %34, %58 : vector<1x1xf32>
    %c11 = arith.constant 11 : index
    %60 = memref.load %arg0[%c11] : memref<13xf32, #tpu.memory_space<smem>>
    %61 = vector.broadcast %60 : f32 to vector<1x1xf32>
    %62 = arith.addf %59, %61 : vector<1x1xf32>
    %63 = arith.negf %62 : vector<1x1xf32>
    %64 = math.exp %63 : vector<1x1xf32>
    %cst_8 = arith.constant 1.000000e+00 : f32
    %65 = vector.broadcast %cst_8 : f32 to vector<1x1xf32>
    %66 = arith.addf %65, %64 : vector<1x1xf32>
    %67 = arith.divf %65, %66 : vector<1x1xf32>
    %c8 = arith.constant 8 : index
    %68 = memref.load %arg0[%c8] : memref<13xf32, #tpu.memory_space<smem>>
    %69 = vector.broadcast %68 : f32 to vector<1x1xf32>
    %70 = arith.mulf %34, %69 : vector<1x1xf32>
    %c12 = arith.constant 12 : index
    %71 = memref.load %arg0[%c12] : memref<13xf32, #tpu.memory_space<smem>>
    %72 = vector.broadcast %71 : f32 to vector<1x1xf32>
    %73 = arith.addf %70, %72 : vector<1x1xf32>
    %74 = arith.negf %73 : vector<1x1xf32>
    %75 = math.exp %74 : vector<1x1xf32>
    %cst_9 = arith.constant 1.000000e+00 : f32
    %76 = vector.broadcast %cst_9 : f32 to vector<1x1xf32>
    %77 = arith.addf %76, %75 : vector<1x1xf32>
    %78 = arith.divf %76, %77 : vector<1x1xf32>
    %79 = vector.extract_strided_slice %4 {offsets = [4, 0], sizes = [1, 1], strides = [1, 1]} : vector<8x1xf32> to vector<1x1xf32>
    %c0_10 = arith.constant 0 : index
    %80 = memref.load %arg0[%c0_10] : memref<13xf32, #tpu.memory_space<smem>>
    %81 = vector.broadcast %80 : f32 to vector<1x1xf32>
    %82 = arith.mulf %79, %81 : vector<1x1xf32>
    %83 = vector.extract_strided_slice %4 {offsets = [5, 0], sizes = [1, 1], strides = [1, 1]} : vector<8x1xf32> to vector<1x1xf32>
    %c1_11 = arith.constant 1 : index
    %84 = memref.load %arg0[%c1_11] : memref<13xf32, #tpu.memory_space<smem>>
    %85 = vector.broadcast %84 : f32 to vector<1x1xf32>
    %86 = arith.mulf %83, %85 : vector<1x1xf32>
    %87 = arith.addf %82, %86 : vector<1x1xf32>
    %88 = vector.extract_strided_slice %4 {offsets = [6, 0], sizes = [1, 1], strides = [1, 1]} : vector<8x1xf32> to vector<1x1xf32>
    %c2_12 = arith.constant 2 : index
    %89 = memref.load %arg0[%c2_12] : memref<13xf32, #tpu.memory_space<smem>>
    %90 = vector.broadcast %89 : f32 to vector<1x1xf32>
    %91 = arith.mulf %88, %90 : vector<1x1xf32>
    %92 = arith.addf %87, %91 : vector<1x1xf32>
    %93 = vector.extract_strided_slice %4 {offsets = [7, 0], sizes = [1, 1], strides = [1, 1]} : vector<8x1xf32> to vector<1x1xf32>
    %c3_13 = arith.constant 3 : index
    %94 = memref.load %arg0[%c3_13] : memref<13xf32, #tpu.memory_space<smem>>
    %95 = vector.broadcast %94 : f32 to vector<1x1xf32>
    %96 = arith.mulf %93, %95 : vector<1x1xf32>
    %97 = arith.addf %92, %96 : vector<1x1xf32>
    %c4_14 = arith.constant 4 : index
    %98 = memref.load %arg0[%c4_14] : memref<13xf32, #tpu.memory_space<smem>>
    %99 = vector.broadcast %98 : f32 to vector<1x1xf32>
    %100 = arith.addf %97, %99 : vector<1x1xf32>
    %cst_15 = arith.constant 5.000000e-01 : f32
    %101 = vector.broadcast %cst_15 : f32 to vector<1x1xf32>
    %102 = arith.mulf %101, %100 : vector<1x1xf32>
    %cst_16 = arith.constant 0.707106769 : f32
    %103 = vector.broadcast %cst_16 : f32 to vector<1x1xf32>
    %104 = arith.mulf %100, %103 : vector<1x1xf32>
    %105 = math.erf %104 : vector<1x1xf32>
    %cst_17 = arith.constant 1.000000e+00 : f32
    %106 = vector.broadcast %cst_17 : f32 to vector<1x1xf32>
    %107 = arith.addf %106, %105 : vector<1x1xf32>
    %108 = arith.mulf %102, %107 : vector<1x1xf32>
    %c5_18 = arith.constant 5 : index
    %109 = memref.load %arg0[%c5_18] : memref<13xf32, #tpu.memory_space<smem>>
    %110 = vector.broadcast %109 : f32 to vector<1x1xf32>
    %111 = arith.mulf %108, %110 : vector<1x1xf32>
    %c9_19 = arith.constant 9 : index
    %112 = memref.load %arg0[%c9_19] : memref<13xf32, #tpu.memory_space<smem>>
    %113 = vector.broadcast %112 : f32 to vector<1x1xf32>
    %114 = arith.addf %111, %113 : vector<1x1xf32>
    %115 = arith.negf %114 : vector<1x1xf32>
    %116 = math.exp %115 : vector<1x1xf32>
    %cst_20 = arith.constant 1.000000e+00 : f32
    %117 = vector.broadcast %cst_20 : f32 to vector<1x1xf32>
    %118 = arith.addf %117, %116 : vector<1x1xf32>
    %119 = arith.divf %117, %118 : vector<1x1xf32>
    %c6_21 = arith.constant 6 : index
    %120 = memref.load %arg0[%c6_21] : memref<13xf32, #tpu.memory_space<smem>>
    %121 = vector.broadcast %120 : f32 to vector<1x1xf32>
    %122 = arith.mulf %108, %121 : vector<1x1xf32>
    %c10_22 = arith.constant 10 : index
    %123 = memref.load %arg0[%c10_22] : memref<13xf32, #tpu.memory_space<smem>>
    %124 = vector.broadcast %123 : f32 to vector<1x1xf32>
    %125 = arith.addf %122, %124 : vector<1x1xf32>
    %126 = arith.negf %125 : vector<1x1xf32>
    %127 = math.exp %126 : vector<1x1xf32>
    %cst_23 = arith.constant 1.000000e+00 : f32
    %128 = vector.broadcast %cst_23 : f32 to vector<1x1xf32>
    %129 = arith.addf %128, %127 : vector<1x1xf32>
    %130 = arith.divf %128, %129 : vector<1x1xf32>
    %c7_24 = arith.constant 7 : index
    %131 = memref.load %arg0[%c7_24] : memref<13xf32, #tpu.memory_space<smem>>
    %132 = vector.broadcast %131 : f32 to vector<1x1xf32>
    %133 = arith.mulf %108, %132 : vector<1x1xf32>
    %c11_25 = arith.constant 11 : index
    %134 = memref.load %arg0[%c11_25] : memref<13xf32, #tpu.memory_space<smem>>
    %135 = vector.broadcast %134 : f32 to vector<1x1xf32>
    %136 = arith.addf %133, %135 : vector<1x1xf32>
    %137 = arith.negf %136 : vector<1x1xf32>
    %138 = math.exp %137 : vector<1x1xf32>
    %cst_26 = arith.constant 1.000000e+00 : f32
    %139 = vector.broadcast %cst_26 : f32 to vector<1x1xf32>
    %140 = arith.addf %139, %138 : vector<1x1xf32>
    %141 = arith.divf %139, %140 : vector<1x1xf32>
    %c8_27 = arith.constant 8 : index
    %142 = memref.load %arg0[%c8_27] : memref<13xf32, #tpu.memory_space<smem>>
    %143 = vector.broadcast %142 : f32 to vector<1x1xf32>
    %144 = arith.mulf %108, %143 : vector<1x1xf32>
    %c12_28 = arith.constant 12 : index
    %145 = memref.load %arg0[%c12_28] : memref<13xf32, #tpu.memory_space<smem>>
    %146 = vector.broadcast %145 : f32 to vector<1x1xf32>
    %147 = arith.addf %144, %146 : vector<1x1xf32>
    %148 = arith.negf %147 : vector<1x1xf32>
    %149 = math.exp %148 : vector<1x1xf32>
    %cst_29 = arith.constant 1.000000e+00 : f32
    %150 = vector.broadcast %cst_29 : f32 to vector<1x1xf32>
    %151 = arith.addf %150, %149 : vector<1x1xf32>
    %152 = arith.divf %150, %151 : vector<1x1xf32>
    %153 = tpu.concatenate %45, %56, %67, %78, %119, %130, %141, %152 in 0 : vector<1x1xf32>, vector<1x1xf32>, vector<1x1xf32>, vector<1x1xf32>, vector<1x1xf32>, vector<1x1xf32>, vector<1x1xf32>, vector<1x1xf32> -> vector<8x1xf32>
    %154 = vector.broadcast %153 : vector<8x1xf32> to vector<8x256xf32>
    %155 = arith.mulf %0, %154 : vector<8x256xf32>
    %c0_30 = arith.constant 0 : index
    %c0_31 = arith.constant 0 : index
    %156 = vector.load %arg2[%c0_30, %c0_31] : memref<8x256xf32, #tpu.memory_space<vmem>>, vector<8x256xf32>
    tpu.vector_store %arg2[%c0_30, %c0_31], %155 {strides = array<i32>} : memref<8x256xf32, #tpu.memory_space<vmem>>, vector<8x256xf32>,
    return
  }
}

</mosaic_0001>

<llo_original>
// kernel: tpu_custom_call.1
$region0: #{tpu_custom_call.1}
  #allocation0 [shape = 'u32[]', space=smem, size = 0x4, offset = 0x4, fixed_abs, tag = 'smem constant byte address 0x4 - core index']
  #allocation1 [shape = 'u32[144,128]{1,0:T(1,128)}', space=vmem, size = 0x12000, scoped, tag = 'internal scratch']
  %s0 = inlined_call_operand.hbm [shape: f32[13], index: 0, kind: input, shape index: {}]
  %s1 = inlined_call_operand.hbm [shape: f32[8,256], index: 1, kind: input, shape index: {}]
  %s2 = inlined_call_operand.hbm [shape: f32[8,256], index: 2, kind: output, shape index: {}]
  %s3 = sld [smem:[#allocation0]]
  $region26: #{tpu_custom_call.1} parent=0
    _
  %s5 = ssub.s32 1, %s3
  %s6 = scalar_select 0, %s5, %s3
  $region1: #{tpu_custom_call.1} parent=0
    #allocation2 [shape = 'u8[512]{0}', space=smem, size = 0x200, scoped, tag = 'input window, operand 0, single buffered']
    #allocation3 [shape = 's32[1]{0}', space=sflag, size = 0x4, scoped, tag = 'scoped memory for tpu_custom_call.1']
    #allocation4 [shape = 's32[1]{0}', space=sflag, size = 0x4, scoped, tag = 'scoped memory for tpu_custom_call.1']
    #allocation5 [shape = 's32[1]{0}', space=sflag, size = 0x4, scoped, tag = 'scoped memory for tpu_custom_call.1']
    #allocation6 [shape = 'u8[8192]{0}', space=vmem, size = 0x2000, scoped, tag = 'input window, operand 1, single buffered']
    #allocation7 [shape = 'u8[8192]{0}', space=vmem, size = 0x2000, scoped, tag = 'output window, operand 0, single buffered']
    %7 = vsyncpa [#allocation5], 0
    %8 = vsyncpa [#allocation3], 0
    %9 = vsyncpa [#allocation4], 0
    // Predicated region
    $region2: #{tpu_custom_call.1} parent=1 // pred_check
      _
    $region3: #{tpu_custom_call.1} parent=1 // pred_check_branch
      %11 = sbr.rel (0) target = $region5
    $region4: #{tpu_custom_call.1} parent=1 // pred_region
      %s13 = ssub.s32 16, 16
      %14 = vsyncadd [#allocation5], %s13
      %17 = dma.hbm_to_smem %s0, 16, [#allocation2], [#allocation5]
    $region5: #{tpu_custom_call.1} parent=1 // pred_fallthru
      _
    // Predicated region
    $region6: #{tpu_custom_call.1} parent=1 // pred_check
      _
    $region7: #{tpu_custom_call.1} parent=1 // pred_check_branch
      %19 = sbr.rel (0) target = $region9
    $region8: #{tpu_custom_call.1} parent=1 // pred_region
      %s21 = ssub.s32 256, 256
      %22 = vsyncadd [#allocation3], %s21
      %s24 = sshll.u32 [#allocation6], 4
      %s25 = int_to_ptr.vmem [resolvable:$true] %s24
      %27 = dma.hbm_to_vmem [thread:$0]  %s1, 256, %s25, [#allocation3]
    $region9: #{tpu_custom_call.1} parent=1 // pred_fallthru
      _
    // Predicated region
    $region10: #{tpu_custom_call.1} parent=1 // pred_check
      _
    $region11: #{tpu_custom_call.1} parent=1 // pred_check_branch
      %29 = sbr.rel (0) target = $region13
    $region12: #{tpu_custom_call.1} parent=1 // pred_region
      %30 = dma.done [#allocation5], 16
    $region13: #{tpu_custom_call.1} parent=1 // pred_fallthru
      _
    // Predicated region
    $region14: #{tpu_custom_call.1} parent=1 // pred_check
      _
    $region15: #{tpu_custom_call.1} parent=1 // pred_check_branch
      %32 = sbr.rel (0) target = $region17
    $region16: #{tpu_custom_call.1} parent=1 // pred_region
      %33 = dma.done [#allocation3], 256
    $region17: #{tpu_custom_call.1} parent=1 // pred_fallthru
      _
    %34 = sfence
    %v35 = vld [vmem:[#allocation6] sm:$0xff]
    %v36 = vld [vmem:[#allocation6 + $0x8] sm:$0xff]
    %v37 = vadd.f32 %v35, %v36
    %38 = vadd.xlane.f32.xlu0 %v37
    %v39 = vpop.xlane.xlu0 %38
    %v40 = vmul.f32 %v39, 0.00390625
    %s41 = sld [smem:[#allocation2]]
    %v42 = vstv %s41
    %v43 = vmul.f32 %v40, %v42
    %s44 = sld [smem:[#allocation2 + $0x1]]
    %v45 = vstv %s44
    %v46 = vmul.f32 %v40, %v45
    %v48 = vrot.slane %v46, 1
    %v50 = vadd.f32 %v43, %v48
    %s51 = sld [smem:[#allocation2 + $0x2]]
    %v52 = vstv %s51
    %v53 = vmul.f32 %v40, %v52
    %v55 = vrot.slane %v53, 2
    %v57 = vadd.f32 %v50, %v55
    %s58 = sld [smem:[#allocation2 + $0x3]]
    %v59 = vstv %s58
    %v60 = vmul.f32 %v40, %v59
    %v62 = vrot.slane %v60, 3
    %v64 = vadd.f32 %v57, %v62
    %s65 = sld [smem:[#allocation2 + $0x4]]
    %v66 = vstv %s65
    %v67 = vadd.f32 %v64, %v66
    %v68 = vmul.f32 %v67, 0.5
    %v69 = vmul.f32 %v67, 0.70710677
    %v70 = verf.f32.pop %v69
    %v71 = vadd.f32 %v70, 1.0
    %v72 = vmul.f32 %v68, %v71
    %s73 = sld [smem:[#allocation2 + $0x5]]
    %v74 = vstv %s73
    %v75 = vmul.f32 %v72, %v74
    %s76 = sld [smem:[#allocation2 + $0x9]]
    %v77 = vstv %s76
    %v78 = vadd.f32 %v75, %v77
    %v79 = vxor.u32 %v78, 2147483648
    %v80 = vmul.f32 %v79, 1.442695
    %v81 = vpow.pop %v80
    %v82 = vadd.f32 %v81, 1.0
    %v83 = vrcp.pop %v82
    %v84 = vmul.f32 1.0, %v83
    %s85 = sld [smem:[#allocation2 + $0x6]]
    %v86 = vstv %s85
    %v87 = vmul.f32 %v72, %v86
    %s88 = sld [smem:[#allocation2 + $0xa]]
    %v89 = vstv %s88
    %v90 = vadd.f32 %v87, %v89
    %v91 = vxor.u32 %v90, 2147483648
    %v92 = vmul.f32 %v91, 1.442695
    %v93 = vpow.pop %v92
    %v94 = vadd.f32 %v93, 1.0
    %v95 = vrcp.pop %v94
    %v96 = vmul.f32 1.0, %v95
    %s97 = sld [smem:[#allocation2 + $0x7]]
    %v98 = vstv %s97
    %v99 = vmul.f32 %v72, %v98
    %s100 = sld [smem:[#allocation2 + $0xb]]
    %v101 = vstv %s100
    %v102 = vadd.f32 %v99, %v101
    %v103 = vxor.u32 %v102, 2147483648
    %v104 = vmul.f32 %v103, 1.442695
    %v105 = vpow.pop %v104
    %v106 = vadd.f32 %v105, 1.0
    %v107 = vrcp.pop %v106
    %v108 = vmul.f32 1.0, %v107
    %s109 = sld [smem:[#allocation2 + $0x8]]
    %v110 = vstv %s109
    %v111 = vmul.f32 %v72, %v110
    %s112 = sld [smem:[#allocation2 + $0xc]]
    %v113 = vstv %s112
    %v114 = vadd.f32 %v111, %v113
    %v115 = vxor.u32 %v114, 2147483648
    %v116 = vmul.f32 %v115, 1.442695
    %v117 = vpow.pop %v116
    %v118 = vadd.f32 %v117, 1.0
    %v119 = vrcp.pop %v118
    %v120 = vmul.f32 1.0, %v119
    %v122 = vrot.slane %v96, 7
    %v125 = vrot.slane %v108, 6
    %v128 = vrot.slane %v120, 5
    %vm130 = vcmask 1040384
    %v131 = vsel %vm130, %v84, %v122
    %vm132 = vcmask 1041408
    %v133 = vsel %vm132, %v131, %v125
    %vm134 = vcmask 1042432
    %v135 = vsel %vm134, %v133, %v128
    %vm136 = vcmask 1043456
    %v137 = vsel %vm136, %v135, %v84
    %vm138 = vcmask 1044480
    %v139 = vsel %vm138, %v137, %v122
    %vm140 = vcmask 1045504
    %v141 = vsel %vm140, %v139, %v125
    %vm142 = vcmask 1046528
    %v143 = vsel %vm142, %v141, %v128
    %145 = vset.pattern.permute.xlu0 0
    %146 = vperm.xlu0 %145, %v143
    %v147 = vpop.permute.xlu0 %146
    %v149 = vmul.f32 %v35, %v147
    %v150 = vmul.f32 %v36, %v147
    %151 = vst [vmem:[#allocation7] sm:$0xff] %v149
    %152 = vst [vmem:[#allocation7 + $0x8] sm:$0xff] %v150
    // Predicated region
    $region18: #{tpu_custom_call.1} parent=1 // pred_check
      _
    $region19: #{tpu_custom_call.1} parent=1 // pred_check_branch
      %154 = sbr.rel (0) target = $region21
    $region20: #{tpu_custom_call.1} parent=1 // pred_region
      %s156 = ssub.s32 256, 256
      %157 = vsyncadd [#allocation4], %s156
      %s159 = sshll.u32 [#allocation7], 4
      %s160 = int_to_ptr.vmem [resolvable:$true] %s159
      %162 = dma.vmem_to_hbm [thread:$0]  %s160, 256, %s2, [#allocation4]
    $region21: #{tpu_custom_call.1} parent=1 // pred_fallthru
      _
    // Predicated region
    $region22: #{tpu_custom_call.1} parent=1 // pred_check
      _
    $region23: #{tpu_custom_call.1} parent=1 // pred_check_branch
      %164 = sbr.rel (0) target = $region25
    $region24: #{tpu_custom_call.1} parent=1 // pred_region
      %165 = dma.done [#allocation4], 256
    $region25: #{tpu_custom_call.1} parent=1 // pred_fallthru
      _
    %166 = vsyncpa [#allocation3], 1
    %167 = vsyncpa [#allocation4], 1
    %168 = vsyncpa [#allocation5], 1

</llo_original>
